<compile_context>
chip_gen: v6e
topology: v6e:2x2x1
jax: 0.10.0
libtpu: 0.0.40
codegen_flags: <defaults>
</compile_context>

<pallas_src>
import math

import jax
import jax.numpy as jnp
from jax.experimental import pallas as pl
from jax.experimental.pallas import tpu as pltpu


def fm_kernel(idx_ref, tab_ref, b_ref, out_ref):
    idx = idx_ref[...]        # (F, bB)   int32   -- field indices, batch on lanes
    tab = tab_ref[...]        # (K+1, V)  float32 -- stacked resident LHS

    F, bB = idx.shape
    kp1, V = tab.shape
    K = kp1 - 1

    # Multi-hot counts (transposed): counts[v, b] = #{f : idx[f, b] == v}.
    # Accumulate in int32; convert to f32 once (cheaper than a float convert
    # per field -- counts build is the dominant VALU work).
    iota_v = jax.lax.broadcasted_iota(jnp.int32, (V, bB), 0)
    counts_i = (idx[0:1, :] == iota_v).astype(jnp.int32)
    for f in range(1, F):                                 # F is tiny & static
        counts_i = counts_i + (idx[f:f + 1, :] == iota_v).astype(jnp.int32)
    counts = counts_i.astype(jnp.float32)

    # One MXU pass: rows 0..K-1 -> sum_f emb[x_f]  (K, bB)
    #               row  K      -> lin_w * fc_sum - 0.5 * sum_f ||emb[x_f]||^2
    res = jnp.dot(tab, counts, precision=jax.lax.Precision.HIGHEST,
                  preferred_element_type=jnp.float32)      # (K+1, bB)

    sum_emb = res[0:K, :]                                  # (K, bB)
    lin_and_sumsq = res[K:K + 1, :]                        # (1, bB)

    # 0.5 * sum_k (sum_f emb)^2 ; the -0.5 * sum_of_square part already rides
    # in lin_and_sumsq via the stacked row.
    sq_of_sum = 0.5 * jnp.sum(sum_emb * sum_emb, axis=0, keepdims=True)

    out_ref[...] = jax.nn.sigmoid(lin_and_sumsq + sq_of_sum + b_ref[0])


def _round_up(x, m):
    return ((x + m - 1) // m) * m


def _choose_block_b(B, V, K, requested):
    """Lane-dense batch tile: multiple of 128, VMEM-aware, megacore-friendly."""
    bb = max(128, min(_round_up(requested, 128), _round_up(B, 128)))
    # Keep the big per-tile intermediates (counts + iota + compare temp at
    # (V, bb) int32/f32, plus the (K+1, bb) matmul result) inside a ~20 MiB
    # budget so we stay comfortably under v7x's 64 MiB VMEM (32 MiB scoped
    # default raised explicitly below).
    per_col_bytes = 4 * (3 * _round_up(V, 8) + (K + 1) + 8)
    max_bb = max(128, ((20 << 20) // per_col_bytes) // 128 * 128)
    bb = min(bb, max_bb)
    # Prefer >= 2 tiles for moderately large batches so the "parallel" grid
    # axis can occupy both v7x TensorCores (no-op on v5e/v6e).
    if B >= 256:
        half = _round_up((B + 1) // 2, 128)
        bb = min(bb, half)
    return bb


def fm_forward(x, emb_table, fc_table, lin_w, lin_b, *, block_b=4096):
    """x: (B, F) int32 indices into the flat feature vocabulary. Returns (B,)."""
    B, F = x.shape
    V, K = emb_table.shape

    bb = _choose_block_b(B, V, K, block_b)
    n_tiles = pl.cdiv(B, bb)
    b_pad = n_tiles * bb

    # Batch on the lane axis; pad with index 0 (garbage columns sliced off).
    idx_t = jnp.pad(x.T.astype(jnp.int32), ((0, 0), (0, b_pad - B)))

    # Host-side precompute of the stacked resident LHS (K+1, V):
    #   [ emb.T ; lin_w * fc.T - 0.5 * row-sum(emb^2) ]
    extra_row = (lin_w[0, 0] * fc_table[:, 0]
                 - 0.5 * jnp.sum(emb_table * emb_table, axis=1))       # (V,)
    tab = jnp.concatenate([emb_table.T.astype(jnp.float32),
                           extra_row[None, :].astype(jnp.float32)], axis=0)

    out = pl.pallas_call(
        fm_kernel,
        out_shape=jax.ShapeDtypeStruct((1, b_pad), jnp.float32),
        grid=(n_tiles,),
        in_specs=[
            pl.BlockSpec((F, bb), lambda i: (0, i)),               # index tile
            pl.BlockSpec((K + 1, V), lambda i: (0, 0)),            # stacked LHS, resident
            pl.BlockSpec(memory_space=pltpu.MemorySpace.SMEM),     # linear bias
        ],
        out_specs=pl.BlockSpec((1, bb), lambda i: (0, i)),         # lane-dense output
        compiler_params=pltpu.CompilerParams(
            dimension_semantics=("parallel",),
            vmem_limit_bytes=64 * 1024 * 1024),
    )(idx_t, tab, lin_b)

    return out[0, :B]                                              # (B,)


def xavier_uniform(key, shape):
    fan_in, fan_out = shape[1], shape[0]   # nn.Embedding weight: (num_emb, dim)
    bound = math.sqrt(6.0 / (fan_in + fan_out))
    return jax.random.uniform(key, shape, jnp.float32, -bound, bound)


if __name__ == "__main__":
    # Small, deterministic configuration.
    fields_dims = [10, 20, 30]           # -> num_inputs = 60
    num_factors = 32
    batch = 8

    num_inputs = int(sum(fields_dims))
    num_fields = len(fields_dims)

    key = jax.random.PRNGKey(0)
    k_emb, k_fc, k_w, k_b, k_x = jax.random.split(key, 5)

    # Parameters (xavier_uniform like the PyTorch init).
    emb_table = xavier_uniform(k_emb, (num_inputs, num_factors))      # (60, 32)
    fc_table = xavier_uniform(k_fc, (num_inputs, 1))                  # (60, 1)
    lin_w = xavier_uniform(k_w, (1, 1))                               # Linear weight
    lin_b = jax.random.uniform(k_b, (1,), jnp.float32, -1.0, 1.0)     # Linear bias

    # Integer feature indices, shape (B, num_fields).
    x = jax.random.randint(k_x, (batch, num_fields), 0, num_inputs, jnp.int32)

    out = fm_forward(x, emb_table, fc_table, lin_w, lin_b)
    jax.block_until_ready(out)

    # Pure-JAX reference (gather-based, matches the PyTorch forward).
    emb = jnp.take(emb_table, x, axis=0)
    sq_of_sum = jnp.sum(emb, axis=1) ** 2
    sum_of_sq = jnp.sum(emb ** 2, axis=1)
    fc_sum = jnp.take(fc_table[:, 0], x, axis=0).sum(axis=1, keepdims=True)
    ref = jax.nn.sigmoid(
        fc_sum * lin_w[0, 0] + lin_b[0]
        + 0.5 * jnp.sum(sq_of_sum - sum_of_sq, axis=1, keepdims=True))[:, 0]

    assert jnp.allclose(out, ref, atol=1e-4, rtol=1e-4), (out, ref)
    print("KERNEL_OK")
</pallas_src>

<mosaic_0001>
module attributes {stable_mosaic.version = 11 : i64} {
  func.func @fm_kernel(%arg0: i32, %arg1: memref<3x128xi32, #tpu.memory_space<vmem>>, %arg2: memref<33x60xf32, #tpu.memory_space<vmem>>, %arg3: memref<1xf32, #tpu.memory_space<smem>>, %arg4: memref<1x128xf32, #tpu.memory_space<vmem>>) attributes {dimension_semantics = [#tpu.dimension_semantics<parallel>], iteration_bounds = array<i64: 1>, scalar_prefetch = 0 : i64, scratch_operands = 0 : i64, tpu.core_type = #tpu.core_type<tc>, window_params = [{transform_indices = @transform_0, window_bounds = array<i64: 3, 128>}, {pipeline_mode = #tpu.pipeline_mode<synchronous>, transform_indices = @transform_1, window_bounds = array<i64: 33, 60>}, {transform_indices = @transform_2, window_bounds = array<i64: 1>}, {transform_indices = @transform_3, window_bounds = array<i64: 1, 128>}]} {
    %c0 = arith.constant 0 : index
    %c0_0 = arith.constant 0 : index
    %0 = vector.load %arg1[%c0, %c0_0] : memref<3x128xi32, #tpu.memory_space<vmem>>, vector<3x128xi32>
    %c0_1 = arith.constant 0 : index
    %c0_2 = arith.constant 0 : index
    %1 = vector.load %arg2[%c0_1, %c0_2] : memref<33x60xf32, #tpu.memory_space<vmem>>, vector<33x60xf32>
    %2 = tpu.iota {dimensions = array<i32: 0>} : vector<60x128xi32>
    %3 = vector.extract_strided_slice %0 {offsets = [0, 0], sizes = [1, 128], strides = [1, 1]} : vector<3x128xi32> to vector<1x128xi32>
    %4 = vector.broadcast %3 : vector<1x128xi32> to vector<60x128xi32>
    %5 = arith.cmpi eq, %4, %2 : vector<60x128xi32>
    %6 = arith.extui %5 : vector<60x128xi1> to vector<60x128xi32>
    %7 = vector.extract_strided_slice %0 {offsets = [1, 0], sizes = [1, 128], strides = [1, 1]} : vector<3x128xi32> to vector<1x128xi32>
    %8 = vector.broadcast %7 : vector<1x128xi32> to vector<60x128xi32>
    %9 = arith.cmpi eq, %8, %2 : vector<60x128xi32>
    %10 = arith.extui %9 : vector<60x128xi1> to vector<60x128xi32>
    %11 = arith.addi %6, %10 : vector<60x128xi32>
    %12 = vector.extract_strided_slice %0 {offsets = [2, 0], sizes = [1, 128], strides = [1, 1]} : vector<3x128xi32> to vector<1x128xi32>
    %13 = vector.broadcast %12 : vector<1x128xi32> to vector<60x128xi32>
    %14 = arith.cmpi eq, %13, %2 : vector<60x128xi32>
    %15 = arith.extui %14 : vector<60x128xi1> to vector<60x128xi32>
    %16 = arith.addi %11, %15 : vector<60x128xi32>
    %17 = arith.sitofp %16 : vector<60x128xi32> to vector<60x128xf32>
    %cst = arith.constant dense<0.000000e+00> : vector<33x128xf32>
    %18 = tpu.matmul %1, %17, %cst {dimension_numbers = #tpu.dot_dimension_numbers<[1], [0], [0], [1], [0, 0, 1, 1], [], []>, precision = #tpu.contract_precision<fp32>} : vector<33x60xf32>, vector<60x128xf32>, vector<33x128xf32> -> vector<33x128xf32>
    %19 = vector.extract_strided_slice %18 {offsets = [0, 0], sizes = [32, 128], strides = [1, 1]} : vector<33x128xf32> to vector<32x128xf32>
    %20 = vector.extract_strided_slice %18 {offsets = [32, 0], sizes = [1, 128], strides = [1, 1]} : vector<33x128xf32> to vector<1x128xf32>
    %21 = arith.mulf %19, %19 : vector<32x128xf32>
    %cst_3 = arith.constant dense<0.000000e+00> : vector<128xf32>
    %22 = vector.multi_reduction <add>, %21, %cst_3 [0] : vector<32x128xf32> to vector<128xf32>
    %23 = vector.shape_cast %22 : vector<128xf32> to vector<1x128xf32>
    %cst_4 = arith.constant 5.000000e-01 : f32
    %24 = vector.broadcast %cst_4 : f32 to vector<1x128xf32>
    %25 = arith.mulf %24, %23 : vector<1x128xf32>
    %26 = arith.addf %20, %25 : vector<1x128xf32>
    %c0_5 = arith.constant 0 : index
    %27 = memref.load %arg3[%c0_5] : memref<1xf32, #tpu.memory_space<smem>>
    %28 = vector.broadcast %27 : f32 to vector<1x128xf32>
    %29 = arith.addf %26, %28 : vector<1x128xf32>
    %30 = arith.negf %29 : vector<1x128xf32>
    %31 = math.exp %30 : vector<1x128xf32>
    %cst_6 = arith.constant 1.000000e+00 : f32
    %32 = vector.broadcast %cst_6 : f32 to vector<1x128xf32>
    %33 = arith.addf %32, %31 : vector<1x128xf32>
    %34 = arith.divf %32, %33 : vector<1x128xf32>
    %c0_7 = arith.constant 0 : index
    %c0_8 = arith.constant 0 : index
    %35 = vector.load %arg4[%c0_7, %c0_8] : memref<1x128xf32, #tpu.memory_space<vmem>>, vector<1x128xf32>
    tpu.vector_store %arg4[%c0_7, %c0_8], %34 {strides = array<i32>} : memref<1x128xf32, #tpu.memory_space<vmem>>, vector<1x128xf32>,
    return
  }
  func.func @transform_0(%arg0: i32) -> (i32, i32) {
    %c0_i32 = arith.constant 0 : i32
    %c0_i32_0 = arith.constant 0 : i32
    return %c0_i32, %arg0 : i32, i32
  }
  func.func @transform_1(%arg0: i32) -> (i32, i32) {
    %c0_i32 = arith.constant 0 : i32
    %c0_i32_0 = arith.constant 0 : i32
    %c0_i32_1 = arith.constant 0 : i32
    return %c0_i32, %c0_i32_0 : i32, i32
  }
  func.func @transform_2(%arg0: i32) -> i32 {
    %c0_i32 = arith.constant 0 : i32
    %c0_i32_0 = arith.constant 0 : i32
    return %c0_i32 : i32
  }
  func.func @transform_3(%arg0: i32) -> (i32, i32) {
    %c0_i32 = arith.constant 0 : i32
    %c0_i32_0 = arith.constant 0 : i32
    return %c0_i32, %arg0 : i32, i32
  }
}

</mosaic_0001>

<llo_original>
// kernel: tpu_custom_call.1
$region0: #{tpu_custom_call.1}
  #allocation0 [shape = 'u32[]', space=smem, size = 0x4, offset = 0x4, fixed_abs, tag = 'smem constant byte address 0x4 - core index']
  #allocation1 [shape = 'u32[144,128]{1,0:T(1,128)}', space=vmem, size = 0x12000, scoped, tag = 'internal scratch']
  #allocation2 [shape = 'f32[1]{0:T(128)S(6)}', space=smem, size = 0x200, scoped, tag = 'scoped memory for tpu_custom_call.1']
  %s0 = inlined_call_operand.hbm [shape: s32[3,128], index: 0, kind: input, shape index: {}]
  %s1 = inlined_call_operand.hbm [shape: f32[33,60], index: 1, kind: input, shape index: {}]
  %s2 = inlined_call_operand.<no memory space> [shape: f32[1], index: 2, kind: input, shape index: {}]
  %s3 = inlined_call_operand.hbm [shape: f32[1,128], index: 3, kind: output, shape index: {}]
  %s4 = sld [smem:[#allocation0]]
  $region30: #{tpu_custom_call.1} parent=0
    _
  %s6 = ssub.s32 1, %s4
  %s7 = scalar_select 0, %s6, %s4
  %8 = sst [smem:[#allocation2]] %s2
  $region1: #{tpu_custom_call.1} parent=0
    #allocation3 [shape = 'u8[2048]{0}', space=vmem, size = 0x800, scoped, tag = 'input window, operand 0, single buffered']
    #allocation4 [shape = 's32[1]{0}', space=sflag, size = 0x4, scoped, tag = 'scoped memory for tpu_custom_call.1']
    #allocation5 [shape = 's32[1]{0}', space=sflag, size = 0x4, scoped, tag = 'scoped memory for tpu_custom_call.1']
    #allocation6 [shape = 'u8[20480]{0}', space=vmem, size = 0x5000, scoped, tag = 'input window, operand 1, single buffered']
    #allocation7 [shape = 's32[1]{0}', space=sflag, size = 0x4, scoped, tag = 'scoped memory for tpu_custom_call.1']
    #allocation8 [shape = 'u8[512]{0}', space=vmem, size = 0x400, scoped, tag = 'output window, operand 0, single buffered']
    %9 = vsyncpa [#allocation4], 0
    %10 = vsyncpa [#allocation7], 0
    %11 = vsyncpa [#allocation5], 0
    // Predicated region
    $region2: #{tpu_custom_call.1} parent=1 // pred_check
      _
    $region3: #{tpu_custom_call.1} parent=1 // pred_check_branch
      %13 = sbr.rel (0) target = $region5
    $region4: #{tpu_custom_call.1} parent=1 // pred_region
      %s15 = ssub.s32 64, 64
      %16 = vsyncadd [#allocation4], %s15
      %s18 = sshll.u32 [#allocation3], 4
      %s19 = int_to_ptr.vmem [resolvable:$true] %s18
      %21 = dma.hbm_to_vmem [thread:$0]  %s0, 64, %s19, [#allocation4]
    $region5: #{tpu_custom_call.1} parent=1 // pred_fallthru
      _
    // Predicated region
    $region6: #{tpu_custom_call.1} parent=1 // pred_check
      _
    $region7: #{tpu_custom_call.1} parent=1 // pred_check_branch
      %23 = sbr.rel (0) target = $region9
    $region8: #{tpu_custom_call.1} parent=1 // pred_region
      %s25 = ssub.s32 640, 640
      %26 = vsyncadd [#allocation7], %s25
      %s27 = sshll.u32 [#allocation6], 4
      %s28 = int_to_ptr.vmem [resolvable:$true] %s27
      %33 = dma.hbm_to_vmem [thread:$0]  %s1, 640, %s28, [#allocation7], 128, 128, 8
    $region9: #{tpu_custom_call.1} parent=1 // pred_fallthru
      _
    // Predicated region
    $region10: #{tpu_custom_call.1} parent=1 // pred_check
      _
    $region11: #{tpu_custom_call.1} parent=1 // pred_check_branch
      %35 = sbr.rel (0) target = $region13
    $region12: #{tpu_custom_call.1} parent=1 // pred_region
      _
    $region13: #{tpu_custom_call.1} parent=1 // pred_fallthru
      _
    // Predicated region
    $region14: #{tpu_custom_call.1} parent=1 // pred_check
      _
    $region15: #{tpu_custom_call.1} parent=1 // pred_check_branch
      %37 = sbr.rel (0) target = $region17
    $region16: #{tpu_custom_call.1} parent=1 // pred_region
      %38 = dma.done [#allocation4], 64
    $region17: #{tpu_custom_call.1} parent=1 // pred_fallthru
      _
    // Predicated region
    $region18: #{tpu_custom_call.1} parent=1 // pred_check
      _
    $region19: #{tpu_custom_call.1} parent=1 // pred_check_branch
      %40 = sbr.rel (0) target = $region21
    $region20: #{tpu_custom_call.1} parent=1 // pred_region
      %41 = dma.done [#allocation7], 640
    $region21: #{tpu_custom_call.1} parent=1 // pred_fallthru
      _
    %v42 = vld [vmem:[#allocation3] sm:$0x7]
    %v43 = vld [vmem:[#allocation6] sm:$0xff]
    %v44 = vld [vmem:[#allocation6 + $0x8] sm:$0xff]
    %v45 = vld [vmem:[#allocation6 + $0x10] sm:$0xff]
    %v46 = vld [vmem:[#allocation6 + $0x18] sm:$0xff]
    %v47 = vld [vmem:[#allocation6 + $0x20] sm:$0x1]
    %v48 = vlaneseq
    %v49 = vshrl.u32 %v48, 7
    %v50 = vadd.s32 %v49, 8
    %v51 = vadd.s32 %v49, 16
    %v52 = vadd.s32 %v49, 24
    %v53 = vadd.s32 %v49, 32
    %v54 = vadd.s32 %v49, 40
    %v55 = vadd.s32 %v49, 48
    %v56 = vadd.s32 %v49, 56
    %v57 = vlaneseq
    %v58 = vshrl.u32 %v57, 7
    %v59 = vsub.s32 0, %v58
    %v60 = vrot.slane %v42, %v59
    %vm61 = vcmp.eq.s32.totalorder %v60, %v49
    %vm62 = vcmp.eq.s32.totalorder %v60, %v50
    %vm63 = vcmp.eq.s32.totalorder %v60, %v51
    %vm64 = vcmp.eq.s32.totalorder %v60, %v52
    %vm65 = vcmp.eq.s32.totalorder %v60, %v53
    %vm66 = vcmp.eq.s32.totalorder %v60, %v54
    %vm67 = vcmp.eq.s32.totalorder %v60, %v55
    %vm68 = vcmp.eq.s32.totalorder %v60, %v56
    %v69 = vsel %vm61, 1, 0
    %v70 = vsel %vm62, 1, 0
    %v71 = vsel %vm63, 1, 0
    %v72 = vsel %vm64, 1, 0
    %v73 = vsel %vm65, 1, 0
    %v74 = vsel %vm66, 1, 0
    %v75 = vsel %vm67, 1, 0
    %v76 = vsel %vm68, 1, 0
    %v77 = vlaneseq
    %v78 = vshrl.u32 %v77, 7
    %v79 = vsub.s32 1, %v78
    %v80 = vrot.slane %v42, %v79
    %vm81 = vcmp.eq.s32.totalorder %v80, %v49
    %vm82 = vcmp.eq.s32.totalorder %v80, %v50
    %vm83 = vcmp.eq.s32.totalorder %v80, %v51
    %vm84 = vcmp.eq.s32.totalorder %v80, %v52
    %vm85 = vcmp.eq.s32.totalorder %v80, %v53
    %vm86 = vcmp.eq.s32.totalorder %v80, %v54
    %vm87 = vcmp.eq.s32.totalorder %v80, %v55
    %vm88 = vcmp.eq.s32.totalorder %v80, %v56
    %v89 = vsel %vm81, 1, 0
    %v90 = vsel %vm82, 1, 0
    %v91 = vsel %vm83, 1, 0
    %v92 = vsel %vm84, 1, 0
    %v93 = vsel %vm85, 1, 0
    %v94 = vsel %vm86, 1, 0
    %v95 = vsel %vm87, 1, 0
    %v96 = vsel %vm88, 1, 0
    %v97 = vadd.s32 %v69, %v89
    %v98 = vadd.s32 %v70, %v90
    %v99 = vadd.s32 %v71, %v91
    %v100 = vadd.s32 %v72, %v92
    %v101 = vadd.s32 %v73, %v93
    %v102 = vadd.s32 %v74, %v94
    %v103 = vadd.s32 %v75, %v95
    %v104 = vadd.s32 %v76, %v96
    %v105 = vlaneseq
    %v106 = vshrl.u32 %v105, 7
    %v107 = vsub.s32 2, %v106
    %v108 = vrot.slane %v42, %v107
    %vm109 = vcmp.eq.s32.totalorder %v108, %v49
    %vm110 = vcmp.eq.s32.totalorder %v108, %v50
    %vm111 = vcmp.eq.s32.totalorder %v108, %v51
    %vm112 = vcmp.eq.s32.totalorder %v108, %v52
    %vm113 = vcmp.eq.s32.totalorder %v108, %v53
    %vm114 = vcmp.eq.s32.totalorder %v108, %v54
    %vm115 = vcmp.eq.s32.totalorder %v108, %v55
    %vm116 = vcmp.eq.s32.totalorder %v108, %v56
    %v117 = vsel %vm109, 1, 0
    %v118 = vsel %vm110, 1, 0
    %v119 = vsel %vm111, 1, 0
    %v120 = vsel %vm112, 1, 0
    %v121 = vsel %vm113, 1, 0
    %v122 = vsel %vm114, 1, 0
    %v123 = vsel %vm115, 1, 0
    %v124 = vsel %vm116, 1, 0
    %v125 = vadd.s32 %v97, %v117
    %v126 = vadd.s32 %v98, %v118
    %v127 = vadd.s32 %v99, %v119
    %v128 = vadd.s32 %v100, %v120
    %v129 = vadd.s32 %v101, %v121
    %v130 = vadd.s32 %v102, %v122
    %v131 = vadd.s32 %v103, %v123
    %v132 = vadd.s32 %v104, %v124
    %v133 = vcvt.s32.f32 %v125
    %v134 = vcvt.s32.f32 %v126
    %v135 = vcvt.s32.f32 %v127
    %v136 = vcvt.s32.f32 %v128
    %v137 = vcvt.s32.f32 %v129
    %v138 = vcvt.s32.f32 %v130
    %v139 = vcvt.s32.f32 %v131
    %v140 = vcvt.s32.f32 %v132
    %vm141 = vcmask 490496
    %v143 = vsel %vm141, %v43, 0
    %v146 = vsel %vm141, %v44, 0
    %v149 = vsel %vm141, %v45, 0
    %v152 = vsel %vm141, %v46, 0
    %v155 = vsel %vm141, %v47, 0
    %vm157 = vcmask 1043456
    %v159 = vsel %vm157, %v140, 0
    %161 = vmatprep.subr.mxu0 0.0
    %162 = vmatpush1.msra.mxu0 0.0
    %163 = vmatprep.subr.mxu0 0.0
    %164 = vmatpush1.msra.mxu0 0.0
    %165 = vmatprep.subr.mxu0 0.0
    %166 = vmatpush1.msra.mxu0 0.0
    %167 = vmatprep.subr.mxu0 0.0
    %168 = vmatpush1.msra.mxu0 0.0
    %169 = vmatprep.subr.mxu0 0.0
    %170 = vmatpush1.msra.mxu0 0.0
    %171 = vmatprep.subr.mxu0 0.0
    %172 = vmatpush1.msra.mxu0 0.0
    %173 = vmatprep.subr.mxu0 0.0
    %174 = vmatpush1.msra.mxu0 0.0
    %175 = vmatprep.subr.mxu0 0.0
    %176 = vmatpush1.msra.mxu0 0.0
    %177 = vmatprep.subr.mxu0 0.0
    %v178 = vand.u32 %v159, 4294901760
    %179 = vmatpush1.msra.mxu0 %v178
    %180 = vmatprep.subr.mxu0 0.0
    %v181 = vand.u32 %v139, 4294901760
    %182 = vmatpush1.msra.mxu0 %v181
    %183 = vmatprep.subr.mxu0 0.0
    %v184 = vand.u32 %v138, 4294901760
    %185 = vmatpush1.msra.mxu0 %v184
    %186 = vmatprep.subr.mxu0 0.0
    %v187 = vand.u32 %v137, 4294901760
    %188 = vmatpush1.msra.mxu0 %v187
    %189 = vmatprep.subr.mxu0 0.0
    %v190 = vand.u32 %v136, 4294901760
    %191 = vmatpush1.msra.mxu0 %v190
    %192 = vmatprep.subr.mxu0 0.0
    %v193 = vand.u32 %v135, 4294901760
    %194 = vmatpush1.msra.mxu0 %v193
    %195 = vmatprep.subr.mxu0 0.0
    %v196 = vand.u32 %v134, 4294901760
    %197 = vmatpush1.msra.mxu0 %v196
    %198 = vmatprep.subr.mxu0 0.0
    %v199 = vand.u32 %v133, 4294901760
    %200 = vmatpush1.msra.mxu0 %v199
    %201 = vmatprep.subr.mxu0 0.0
    %202 = vmatpush2.msra.mxu0 0.0
    %203 = vmatprep.subr.mxu0 0.0
    %204 = vmatpush2.msra.mxu0 0.0
    %205 = vmatprep.subr.mxu0 0.0
    %206 = vmatpush2.msra.mxu0 0.0
    %207 = vmatprep.subr.mxu0 0.0
    %208 = vmatpush2.msra.mxu0 0.0
    %209 = vmatprep.subr.mxu0 0.0
    %210 = vmatpush2.msra.mxu0 0.0
    %211 = vmatprep.subr.mxu0 0.0
    %212 = vmatpush2.msra.mxu0 0.0
    %213 = vmatprep.subr.mxu0 0.0
    %214 = vmatpush2.msra.mxu0 0.0
    %215 = vmatprep.subr.mxu0 0.0
    %216 = vmatpush2.msra.mxu0 0.0
    %217 = vmatprep.subr.mxu0 0.0
    %218 = vmatpush2.msra.mxu0 0.0
    %219 = vmatprep.subr.mxu0 0.0
    %220 = vmatpush2.msra.mxu0 0.0
    %221 = vmatprep.subr.mxu0 0.0
    %222 = vmatpush2.msra.mxu0 0.0
    %223 = vmatprep.subr.mxu0 0.0
    %224 = vmatpush2.msra.mxu0 0.0
    %225 = vmatprep.subr.mxu0 0.0
    %226 = vmatpush2.msra.mxu0 0.0
    %227 = vmatprep.subr.mxu0 0.0
    %228 = vmatpush2.msra.mxu0 0.0
    %229 = vmatprep.subr.mxu0 0.0
    %230 = vmatpush2.msra.mxu0 0.0
    %231 = vmatprep.subr.mxu0 0.0
    %232 = vmatpush2.msra.mxu0 0.0
    %233 = vmatprep.mubr.f32.mxu0 0.0
    %v234 = vand.u32 %v143, 4294901760
    %v235 = vsub.f32 %v143, %v234
    %v236 = vand.u32 %v235, 4294901760
    %v237 = vsub.f32 %v235, %v236
    %v238 = vand.u32 %v237, 4294901760
    %239 = vmatmul.mubr.f32.gmra.mxu0 %v238
    %v240 = vpop.f32.mrf.mxu0
    %v241 = vadd.f32 0.0, %v240
    %v242 = vpop.f32.mrf.mxu0
    %243 = vmatprep.mubr.f32.mxu0 0.0
    %v244 = vand.u32 %v146, 4294901760
    %v245 = vsub.f32 %v146, %v244
    %v246 = vand.u32 %v245, 4294901760
    %v247 = vsub.f32 %v245, %v246
    %v248 = vand.u32 %v247, 4294901760
    %249 = vmatmul.mubr.f32.gmra.mxu0 %v248
    %v250 = vpop.f32.mrf.mxu0
    %v251 = vadd.f32 0.0, %v250
    %v252 = vpop.f32.mrf.mxu0
    %253 = vmatprep.mubr.f32.mxu0 0.0
    %v254 = vand.u32 %v149, 4294901760
    %v255 = vsub.f32 %v149, %v254
    %v256 = vand.u32 %v255, 4294901760
    %v257 = vsub.f32 %v255, %v256
    %v258 = vand.u32 %v257, 4294901760
    %259 = vmatmul.mubr.f32.gmra.mxu0 %v258
    %v260 = vpop.f32.mrf.mxu0
    %v261 = vadd.f32 0.0, %v260
    %v262 = vpop.f32.mrf.mxu0
    %263 = vmatprep.mubr.f32.mxu0 0.0
    %v264 = vand.u32 %v152, 4294901760
    %v265 = vsub.f32 %v152, %v264
    %v266 = vand.u32 %v265, 4294901760
    %v267 = vsub.f32 %v265, %v266
    %v268 = vand.u32 %v267, 4294901760
    %269 = vmatmul.mubr.f32.gmra.mxu0 %v268
    %v270 = vpop.f32.mrf.mxu0
    %v271 = vadd.f32 0.0, %v270
    %v272 = vpop.f32.mrf.mxu0
    %273 = vmatprep.mubr.f32.mxu0 0.0
    %v274 = vand.u32 %v155, 4294901760
    %v275 = vsub.f32 %v155, %v274
    %v276 = vand.u32 %v275, 4294901760
    %v277 = vsub.f32 %v275, %v276
    %v278 = vand.u32 %v277, 4294901760
    %279 = vmatmul.mubr.f32.gmra.mxu0 %v278
    %v280 = vpop.f32.mrf.mxu0
    %v281 = vadd.f32 0.0, %v280
    %v282 = vpop.f32.mrf.mxu0
    %283 = vdwg.mxu0
    %284 = vmatprep.subr.mxu0 0.0
    %285 = vmatpush1.msra.mxu0 0.0
    %286 = vmatprep.subr.mxu0 0.0
    %287 = vmatpush1.msra.mxu0 0.0
    %288 = vmatprep.subr.mxu0 0.0
    %289 = vmatpush1.msra.mxu0 0.0
    %290 = vmatprep.subr.mxu0 0.0
    %291 = vmatpush1.msra.mxu0 0.0
    %292 = vmatprep.subr.mxu0 0.0
    %293 = vmatpush1.msra.mxu0 0.0
    %294 = vmatprep.subr.mxu0 0.0
    %295 = vmatpush1.msra.mxu0 0.0
    %296 = vmatprep.subr.mxu0 0.0
    %297 = vmatpush1.msra.mxu0 0.0
    %298 = vmatprep.subr.mxu0 0.0
    %299 = vmatpush1.msra.mxu0 0.0
    %300 = vmatprep.subr.mxu0 0.0
    %v301 = vand.u32 %v159, 4294901760
    %v302 = vsub.f32 %v159, %v301
    %v303 = vand.u32 %v302, 4294901760
    %v304 = vsub.f32 %v302, %v303
    %v305 = vand.u32 %v304, 4294901760
    %306 = vmatpush1.msra.mxu0 %v305
    %307 = vmatprep.subr.mxu0 0.0
    %v308 = vand.u32 %v139, 4294901760
    %v309 = vsub.f32 %v139, %v308
    %v310 = vand.u32 %v309, 4294901760
    %v311 = vsub.f32 %v309, %v310
    %v312 = vand.u32 %v311, 4294901760
    %313 = vmatpush1.msra.mxu0 %v312
    %314 = vmatprep.subr.mxu0 0.0
    %v315 = vand.u32 %v138, 4294901760
    %v316 = vsub.f32 %v138, %v315
    %v317 = vand.u32 %v316, 4294901760
    %v318 = vsub.f32 %v316, %v317
    %v319 = vand.u32 %v318, 4294901760
    %320 = vmatpush1.msra.mxu0 %v319
    %321 = vmatprep.subr.mxu0 0.0
    %v322 = vand.u32 %v137, 4294901760
    %v323 = vsub.f32 %v137, %v322
    %v324 = vand.u32 %v323, 4294901760
    %v325 = vsub.f32 %v323, %v324
    %v326 = vand.u32 %v325, 4294901760
    %327 = vmatpush1.msra.mxu0 %v326
    %328 = vmatprep.subr.mxu0 0.0
    %v329 = vand.u32 %v136, 4294901760
    %v330 = vsub.f32 %v136, %v329
    %v331 = vand.u32 %v330, 4294901760
    %v332 = vsub.f32 %v330, %v331
    %v333 = vand.u32 %v332, 4294901760
    %334 = vmatpush1.msra.mxu0 %v333
    %335 = vmatprep.subr.mxu0 0.0
    %v336 = vand.u32 %v135, 4294901760
    %v337 = vsub.f32 %v135, %v336
    %v338 = vand.u32 %v337, 4294901760
    %v339 = vsub.f32 %v337, %v338
    %v340 = vand.u32 %v339, 4294901760
    %341 = vmatpush1.msra.mxu0 %v340
    %342 = vmatprep.subr.mxu0 0.0
    %v343 = vand.u32 %v134, 4294901760
    %v344 = vsub.f32 %v134, %v343
    %v345 = vand.u32 %v344, 4294901760
    %v346 = vsub.f32 %v344, %v345
    %v347 = vand.u32 %v346, 4294901760
    %348 = vmatpush1.msra.mxu0 %v347
    %349 = vmatprep.subr.mxu0 0.0
    %v350 = vand.u32 %v133, 4294901760
    %v351 = vsub.f32 %v133, %v350
    %v352 = vand.u32 %v351, 4294901760
    %v353 = vsub.f32 %v351, %v352
    %v354 = vand.u32 %v353, 4294901760
    %355 = vmatpush1.msra.mxu0 %v354
    %356 = vmatprep.subr.mxu0 0.0
    %357 = vmatpush2.msra.mxu0 0.0
    %358 = vmatprep.subr.mxu0 0.0
    %359 = vmatpush2.msra.mxu0 0.0
    %360 = vmatprep.subr.mxu0 0.0
    %361 = vmatpush2.msra.mxu0 0.0
    %362 = vmatprep.subr.mxu0 0.0
    %363 = vmatpush2.msra.mxu0 0.0
    %364 = vmatprep.subr.mxu0 0.0
    %365 = vmatpush2.msra.mxu0 0.0
    %366 = vmatprep.subr.mxu0 0.0
    %367 = vmatpush2.msra.mxu0 0.0
    %368 = vmatprep.subr.mxu0 0.0
    %369 = vmatpush2.msra.mxu0 0.0
    %370 = vmatprep.subr.mxu0 0.0
    %371 = vmatpush2.msra.mxu0 0.0
    %372 = vmatprep.subr.mxu0 0.0
    %373 = vmatpush2.msra.mxu0 0.0
    %374 = vmatprep.subr.mxu0 0.0
    %375 = vmatpush2.msra.mxu0 0.0
    %376 = vmatprep.subr.mxu0 0.0
    %377 = vmatpush2.msra.mxu0 0.0
    %378 = vmatprep.subr.mxu0 0.0
    %379 = vmatpush2.msra.mxu0 0.0
    %380 = vmatprep.subr.mxu0 0.0
    %381 = vmatpush2.msra.mxu0 0.0
    %382 = vmatprep.subr.mxu0 0.0
    %383 = vmatpush2.msra.mxu0 0.0
    %384 = vmatprep.subr.mxu0 0.0
    %385 = vmatpush2.msra.mxu0 0.0
    %386 = vmatprep.subr.mxu0 0.0
    %387 = vmatpush2.msra.mxu0 0.0
    %388 = vmatprep.mubr.f32.mxu0 0.0
    %v389 = vand.u32 %v143, 4294901760
    %390 = vmatmul.mubr.f32.gmra.mxu0 %v389
    %v391 = vpop.f32.mrf.mxu0
    %v392 = vadd.f32 %v241, %v391
    %v393 = vpop.f32.mrf.mxu0
    %394 = vmatprep.mubr.f32.mxu0 0.0
    %v395 = vand.u32 %v146, 4294901760
    %396 = vmatmul.mubr.f32.gmra.mxu0 %v395
    %v397 = vpop.f32.mrf.mxu0
    %v398 = vadd.f32 %v251, %v397
    %v399 = vpop.f32.mrf.mxu0
    %400 = vmatprep.mubr.f32.mxu0 0.0
    %v401 = vand.u32 %v149, 4294901760
    %402 = vmatmul.mubr.f32.gmra.mxu0 %v401
    %v403 = vpop.f32.mrf.mxu0
    %v404 = vadd.f32 %v261, %v403
    %v405 = vpop.f32.mrf.mxu0
    %406 = vmatprep.mubr.f32.mxu0 0.0
    %v407 = vand.u32 %v152, 4294901760
    %408 = vmatmul.mubr.f32.gmra.mxu0 %v407
    %v409 = vpop.f32.mrf.mxu0
    %v410 = vadd.f32 %v271, %v409
    %v411 = vpop.f32.mrf.mxu0
    %412 = vmatprep.mubr.f32.mxu0 0.0
    %v413 = vand.u32 %v155, 4294901760
    %414 = vmatmul.mubr.f32.gmra.mxu0 %v413
    %v415 = vpop.f32.mrf.mxu0
    %v416 = vadd.f32 %v281, %v415
    %v417 = vpop.f32.mrf.mxu0
    %418 = vdwg.mxu0
    %419 = vmatprep.subr.mxu0 0.0
    %420 = vmatpush1.msra.mxu0 0.0
    %421 = vmatprep.subr.mxu0 0.0
    %422 = vmatpush1.msra.mxu0 0.0
    %423 = vmatprep.subr.mxu0 0.0
    %424 = vmatpush1.msra.mxu0 0.0
    %425 = vmatprep.subr.mxu0 0.0
    %426 = vmatpush1.msra.mxu0 0.0
    %427 = vmatprep.subr.mxu0 0.0
    %428 = vmatpush1.msra.mxu0 0.0
    %429 = vmatprep.subr.mxu0 0.0
    %430 = vmatpush1.msra.mxu0 0.0
    %431 = vmatprep.subr.mxu0 0.0
    %432 = vmatpush1.msra.mxu0 0.0
    %433 = vmatprep.subr.mxu0 0.0
    %434 = vmatpush1.msra.mxu0 0.0
    %435 = vmatprep.subr.mxu0 0.0
    %v436 = vand.u32 %v159, 4294901760
    %v437 = vsub.f32 %v159, %v436
    %438 = vmatpush1.msra.mxu0 %v437
    %439 = vmatprep.subr.mxu0 0.0
    %v440 = vand.u32 %v139, 4294901760
    %v441 = vsub.f32 %v139, %v440
    %442 = vmatpush1.msra.mxu0 %v441
    %443 = vmatprep.subr.mxu0 0.0
    %v444 = vand.u32 %v138, 4294901760
    %v445 = vsub.f32 %v138, %v444
    %446 = vmatpush1.msra.mxu0 %v445
    %447 = vmatprep.subr.mxu0 0.0
    %v448 = vand.u32 %v137, 4294901760
    %v449 = vsub.f32 %v137, %v448
    %450 = vmatpush1.msra.mxu0 %v449
    %451 = vmatprep.subr.mxu0 0.0
    %v452 = vand.u32 %v136, 4294901760
    %v453 = vsub.f32 %v136, %v452
    %454 = vmatpush1.msra.mxu0 %v453
    %455 = vmatprep.subr.mxu0 0.0
    %v456 = vand.u32 %v135, 4294901760
    %v457 = vsub.f32 %v135, %v456
    %458 = vmatpush1.msra.mxu0 %v457
    %459 = vmatprep.subr.mxu0 0.0
    %v460 = vand.u32 %v134, 4294901760
    %v461 = vsub.f32 %v134, %v460
    %462 = vmatpush1.msra.mxu0 %v461
    %463 = vmatprep.subr.mxu0 0.0
    %v464 = vand.u32 %v133, 4294901760
    %v465 = vsub.f32 %v133, %v464
    %466 = vmatpush1.msra.mxu0 %v465
    %467 = vmatprep.subr.mxu0 0.0
    %468 = vmatpush2.msra.mxu0 0.0
    %469 = vmatprep.subr.mxu0 0.0
    %470 = vmatpush2.msra.mxu0 0.0
    %471 = vmatprep.subr.mxu0 0.0
    %472 = vmatpush2.msra.mxu0 0.0
    %473 = vmatprep.subr.mxu0 0.0
    %474 = vmatpush2.msra.mxu0 0.0
    %475 = vmatprep.subr.mxu0 0.0
    %476 = vmatpush2.msra.mxu0 0.0
    %477 = vmatprep.subr.mxu0 0.0
    %478 = vmatpush2.msra.mxu0 0.0
    %479 = vmatprep.subr.mxu0 0.0
    %480 = vmatpush2.msra.mxu0 0.0
    %481 = vmatprep.subr.mxu0 0.0
    %482 = vmatpush2.msra.mxu0 0.0
    %483 = vmatprep.subr.mxu0 0.0
    %484 = vmatpush2.msra.mxu0 0.0
    %485 = vmatprep.subr.mxu0 0.0
    %486 = vmatpush2.msra.mxu0 0.0
    %487 = vmatprep.subr.mxu0 0.0
    %488 = vmatpush2.msra.mxu0 0.0
    %489 = vmatprep.subr.mxu0 0.0
    %490 = vmatpush2.msra.mxu0 0.0
    %491 = vmatprep.subr.mxu0 0.0
    %492 = vmatpush2.msra.mxu0 0.0
    %493 = vmatprep.subr.mxu0 0.0
    %494 = vmatpush2.msra.mxu0 0.0
    %495 = vmatprep.subr.mxu0 0.0
    %496 = vmatpush2.msra.mxu0 0.0
    %497 = vmatprep.subr.mxu0 0.0
    %498 = vmatpush2.msra.mxu0 0.0
    %499 = vmatprep.mubr.f32.mxu0 0.0
    %v500 = vand.u32 %v143, 4294901760
    %v501 = vsub.f32 %v143, %v500
    %502 = vmatmul.mubr.f32.gmra.mxu0 %v501
    %v503 = vpop.f32.mrf.mxu0
    %v504 = vadd.f32 %v392, %v503
    %v505 = vpop.f32.mrf.mxu0
    %506 = vmatprep.mubr.f32.mxu0 0.0
    %v507 = vand.u32 %v146, 4294901760
    %v508 = vsub.f32 %v146, %v507
    %509 = vmatmul.mubr.f32.gmra.mxu0 %v508
    %v510 = vpop.f32.mrf.mxu0
    %v511 = vadd.f32 %v398, %v510
    %v512 = vpop.f32.mrf.mxu0
    %513 = vmatprep.mubr.f32.mxu0 0.0
    %v514 = vand.u32 %v149, 4294901760
    %v515 = vsub.f32 %v149, %v514
    %516 = vmatmul.mubr.f32.gmra.mxu0 %v515
    %v517 = vpop.f32.mrf.mxu0
    %v518 = vadd.f32 %v404, %v517
    %v519 = vpop.f32.mrf.mxu0
    %520 = vmatprep.mubr.f32.mxu0 0.0
    %v521 = vand.u32 %v152, 4294901760
    %v522 = vsub.f32 %v152, %v521
    %523 = vmatmul.mubr.f32.gmra.mxu0 %v522
    %v524 = vpop.f32.mrf.mxu0
    %v525 = vadd.f32 %v410, %v524
    %v526 = vpop.f32.mrf.mxu0
    %527 = vmatprep.mubr.f32.mxu0 0.0
    %v528 = vand.u32 %v155, 4294901760
    %v529 = vsub.f32 %v155, %v528
    %530 = vmatmul.mubr.f32.gmra.mxu0 %v529
    %v531 = vpop.f32.mrf.mxu0
    %v532 = vadd.f32 %v416, %v531
    %v533 = vpop.f32.mrf.mxu0
    %534 = vdwg.mxu0
    %535 = vmatprep.subr.mxu0 0.0
    %536 = vmatpush1.msra.mxu0 0.0
    %537 = vmatprep.subr.mxu0 0.0
    %538 = vmatpush1.msra.mxu0 0.0
    %539 = vmatprep.subr.mxu0 0.0
    %540 = vmatpush1.msra.mxu0 0.0
    %541 = vmatprep.subr.mxu0 0.0
    %542 = vmatpush1.msra.mxu0 0.0
    %543 = vmatprep.subr.mxu0 0.0
    %544 = vmatpush1.msra.mxu0 0.0
    %545 = vmatprep.subr.mxu0 0.0
    %546 = vmatpush1.msra.mxu0 0.0
    %547 = vmatprep.subr.mxu0 0.0
    %548 = vmatpush1.msra.mxu0 0.0
    %549 = vmatprep.subr.mxu0 0.0
    %550 = vmatpush1.msra.mxu0 0.0
    %551 = vmatprep.subr.mxu0 0.0
    %v552 = vand.u32 %v159, 4294901760
    %553 = vmatpush1.msra.mxu0 %v552
    %554 = vmatprep.subr.mxu0 0.0
    %v555 = vand.u32 %v139, 4294901760
    %556 = vmatpush1.msra.mxu0 %v555
    %557 = vmatprep.subr.mxu0 0.0
    %v558 = vand.u32 %v138, 4294901760
    %559 = vmatpush1.msra.mxu0 %v558
    %560 = vmatprep.subr.mxu0 0.0
    %v561 = vand.u32 %v137, 4294901760
    %562 = vmatpush1.msra.mxu0 %v561
    %563 = vmatprep.subr.mxu0 0.0
    %v564 = vand.u32 %v136, 4294901760
    %565 = vmatpush1.msra.mxu0 %v564
    %566 = vmatprep.subr.mxu0 0.0
    %v567 = vand.u32 %v135, 4294901760
    %568 = vmatpush1.msra.mxu0 %v567
    %569 = vmatprep.subr.mxu0 0.0
    %v570 = vand.u32 %v134, 4294901760
    %571 = vmatpush1.msra.mxu0 %v570
    %572 = vmatprep.subr.mxu0 0.0
    %v573 = vand.u32 %v133, 4294901760
    %574 = vmatpush1.msra.mxu0 %v573
    %575 = vmatprep.subr.mxu0 0.0
    %576 = vmatpush2.msra.mxu0 0.0
    %577 = vmatprep.subr.mxu0 0.0
    %578 = vmatpush2.msra.mxu0 0.0
    %579 = vmatprep.subr.mxu0 0.0
    %580 = vmatpush2.msra.mxu0 0.0
    %581 = vmatprep.subr.mxu0 0.0
    %582 = vmatpush2.msra.mxu0 0.0
    %583 = vmatprep.subr.mxu0 0.0
    %584 = vmatpush2.msra.mxu0 0.0
    %585 = vmatprep.subr.mxu0 0.0
    %586 = vmatpush2.msra.mxu0 0.0
    %587 = vmatprep.subr.mxu0 0.0
    %588 = vmatpush2.msra.mxu0 0.0
    %589 = vmatprep.subr.mxu0 0.0
    %590 = vmatpush2.msra.mxu0 0.0
    %591 = vmatprep.subr.mxu0 0.0
    %592 = vmatpush2.msra.mxu0 0.0
    %593 = vmatprep.subr.mxu0 0.0
    %594 = vmatpush2.msra.mxu0 0.0
    %595 = vmatprep.subr.mxu0 0.0
    %596 = vmatpush2.msra.mxu0 0.0
    %597 = vmatprep.subr.mxu0 0.0
    %598 = vmatpush2.msra.mxu0 0.0
    %599 = vmatprep.subr.mxu0 0.0
    %600 = vmatpush2.msra.mxu0 0.0
    %601 = vmatprep.subr.mxu0 0.0
    %602 = vmatpush2.msra.mxu0 0.0
    %603 = vmatprep.subr.mxu0 0.0
    %604 = vmatpush2.msra.mxu0 0.0
    %605 = vmatprep.subr.mxu0 0.0
    %606 = vmatpush2.msra.mxu0 0.0
    %607 = vmatprep.mubr.f32.mxu0 0.0
    %v608 = vand.u32 %v143, 4294901760
    %v609 = vsub.f32 %v143, %v608
    %v610 = vand.u32 %v609, 4294901760
    %611 = vmatmul.mubr.f32.gmra.mxu0 %v610
    %v612 = vpop.f32.mrf.mxu0
    %v613 = vadd.f32 %v504, %v612
    %v614 = vpop.f32.mrf.mxu0
    %615 = vmatprep.mubr.f32.mxu0 0.0
    %v616 = vand.u32 %v146, 4294901760
    %v617 = vsub.f32 %v146, %v616
    %v618 = vand.u32 %v617, 4294901760
    %619 = vmatmul.mubr.f32.gmra.mxu0 %v618
    %v620 = vpop.f32.mrf.mxu0
    %v621 = vadd.f32 %v511, %v620
    %v622 = vpop.f32.mrf.mxu0
    %623 = vmatprep.mubr.f32.mxu0 0.0
    %v624 = vand.u32 %v149, 4294901760
    %v625 = vsub.f32 %v149, %v624
    %v626 = vand.u32 %v625, 4294901760
    %627 = vmatmul.mubr.f32.gmra.mxu0 %v626
    %v628 = vpop.f32.mrf.mxu0
    %v629 = vadd.f32 %v518, %v628
    %v630 = vpop.f32.mrf.mxu0
    %631 = vmatprep.mubr.f32.mxu0 0.0
    %v632 = vand.u32 %v152, 4294901760
    %v633 = vsub.f32 %v152, %v632
    %v634 = vand.u32 %v633, 4294901760
    %635 = vmatmul.mubr.f32.gmra.mxu0 %v634
    %v636 = vpop.f32.mrf.mxu0
    %v637 = vadd.f32 %v525, %v636
    %v638 = vpop.f32.mrf.mxu0
    %639 = vmatprep.mubr.f32.mxu0 0.0
    %v640 = vand.u32 %v155, 4294901760
    %v641 = vsub.f32 %v155, %v640
    %v642 = vand.u32 %v641, 4294901760
    %643 = vmatmul.mubr.f32.gmra.mxu0 %v642
    %v644 = vpop.f32.mrf.mxu0
    %v645 = vadd.f32 %v532, %v644
    %v646 = vpop.f32.mrf.mxu0
    %647 = vdwg.mxu0
    %648 = vmatprep.subr.mxu0 0.0
    %649 = vmatpush1.msra.mxu0 0.0
    %650 = vmatprep.subr.mxu0 0.0
    %651 = vmatpush1.msra.mxu0 0.0
    %652 = vmatprep.subr.mxu0 0.0
    %653 = vmatpush1.msra.mxu0 0.0
    %654 = vmatprep.subr.mxu0 0.0
    %655 = vmatpush1.msra.mxu0 0.0
    %656 = vmatprep.subr.mxu0 0.0
    %657 = vmatpush1.msra.mxu0 0.0
    %658 = vmatprep.subr.mxu0 0.0
    %659 = vmatpush1.msra.mxu0 0.0
    %660 = vmatprep.subr.mxu0 0.0
    %661 = vmatpush1.msra.mxu0 0.0
    %662 = vmatprep.subr.mxu0 0.0
    %663 = vmatpush1.msra.mxu0 0.0
    %664 = vmatprep.subr.mxu0 0.0
    %v665 = vand.u32 %v159, 4294901760
    %v666 = vsub.f32 %v159, %v665
    %v667 = vand.u32 %v666, 4294901760
    %668 = vmatpush1.msra.mxu0 %v667
    %669 = vmatprep.subr.mxu0 0.0
    %v670 = vand.u32 %v139, 4294901760
    %v671 = vsub.f32 %v139, %v670
    %v672 = vand.u32 %v671, 4294901760
    %673 = vmatpush1.msra.mxu0 %v672
    %674 = vmatprep.subr.mxu0 0.0
    %v675 = vand.u32 %v138, 4294901760
    %v676 = vsub.f32 %v138, %v675
    %v677 = vand.u32 %v676, 4294901760
    %678 = vmatpush1.msra.mxu0 %v677
    %679 = vmatprep.subr.mxu0 0.0
    %v680 = vand.u32 %v137, 4294901760
    %v681 = vsub.f32 %v137, %v680
    %v682 = vand.u32 %v681, 4294901760
    %683 = vmatpush1.msra.mxu0 %v682
    %684 = vmatprep.subr.mxu0 0.0
    %v685 = vand.u32 %v136, 4294901760
    %v686 = vsub.f32 %v136, %v685
    %v687 = vand.u32 %v686, 4294901760
    %688 = vmatpush1.msra.mxu0 %v687
    %689 = vmatprep.subr.mxu0 0.0
    %v690 = vand.u32 %v135, 4294901760
    %v691 = vsub.f32 %v135, %v690
    %v692 = vand.u32 %v691, 4294901760
    %693 = vmatpush1.msra.mxu0 %v692
    %694 = vmatprep.subr.mxu0 0.0
    %v695 = vand.u32 %v134, 4294901760
    %v696 = vsub.f32 %v134, %v695
    %v697 = vand.u32 %v696, 4294901760
    %698 = vmatpush1.msra.mxu0 %v697
    %699 = vmatprep.subr.mxu0 0.0
    %v700 = vand.u32 %v133, 4294901760
    %v701 = vsub.f32 %v133, %v700
    %v702 = vand.u32 %v701, 4294901760
    %703 = vmatpush1.msra.mxu0 %v702
    %704 = vmatprep.subr.mxu0 0.0
    %705 = vmatpush2.msra.mxu0 0.0
    %706 = vmatprep.subr.mxu0 0.0
    %707 = vmatpush2.msra.mxu0 0.0
    %708 = vmatprep.subr.mxu0 0.0
    %709 = vmatpush2.msra.mxu0 0.0
    %710 = vmatprep.subr.mxu0 0.0
    %711 = vmatpush2.msra.mxu0 0.0
    %712 = vmatprep.subr.mxu0 0.0
    %713 = vmatpush2.msra.mxu0 0.0
    %714 = vmatprep.subr.mxu0 0.0
    %715 = vmatpush2.msra.mxu0 0.0
    %716 = vmatprep.subr.mxu0 0.0
    %717 = vmatpush2.msra.mxu0 0.0
    %718 = vmatprep.subr.mxu0 0.0
    %719 = vmatpush2.msra.mxu0 0.0
    %720 = vmatprep.subr.mxu0 0.0
    %721 = vmatpush2.msra.mxu0 0.0
    %722 = vmatprep.subr.mxu0 0.0
    %723 = vmatpush2.msra.mxu0 0.0
    %724 = vmatprep.subr.mxu0 0.0
    %725 = vmatpush2.msra.mxu0 0.0
    %726 = vmatprep.subr.mxu0 0.0
    %727 = vmatpush2.msra.mxu0 0.0
    %728 = vmatprep.subr.mxu0 0.0
    %729 = vmatpush2.msra.mxu0 0.0
    %730 = vmatprep.subr.mxu0 0.0
    %731 = vmatpush2.msra.mxu0 0.0
    %732 = vmatprep.subr.mxu0 0.0
    %733 = vmatpush2.msra.mxu0 0.0
    %734 = vmatprep.subr.mxu0 0.0
    %735 = vmatpush2.msra.mxu0 0.0
    %736 = vmatprep.mubr.f32.mxu0 0.0
    %v737 = vand.u32 %v143, 4294901760
    %738 = vmatmul.mubr.f32.gmra.mxu0 %v737
    %v739 = vpop.f32.mrf.mxu0
    %v740 = vadd.f32 %v613, %v739
    %v741 = vpop.f32.mrf.mxu0
    %742 = vmatprep.mubr.f32.mxu0 0.0
    %v743 = vand.u32 %v146, 4294901760
    %744 = vmatmul.mubr.f32.gmra.mxu0 %v743
    %v745 = vpop.f32.mrf.mxu0
    %v746 = vadd.f32 %v621, %v745
    %v747 = vpop.f32.mrf.mxu0
    %748 = vmatprep.mubr.f32.mxu0 0.0
    %v749 = vand.u32 %v149, 4294901760
    %750 = vmatmul.mubr.f32.gmra.mxu0 %v749
    %v751 = vpop.f32.mrf.mxu0
    %v752 = vadd.f32 %v629, %v751
    %v753 = vpop.f32.mrf.mxu0
    %754 = vmatprep.mubr.f32.mxu0 0.0
    %v755 = vand.u32 %v152, 4294901760
    %756 = vmatmul.mubr.f32.gmra.mxu0 %v755
    %v757 = vpop.f32.mrf.mxu0
    %v758 = vadd.f32 %v637, %v757
    %v759 = vpop.f32.mrf.mxu0
    %760 = vmatprep.mubr.f32.mxu0 0.0
    %v761 = vand.u32 %v155, 4294901760
    %762 = vmatmul.mubr.f32.gmra.mxu0 %v761
    %v763 = vpop.f32.mrf.mxu0
    %v764 = vadd.f32 %v645, %v763
    %v765 = vpop.f32.mrf.mxu0
    %766 = vdwg.mxu0
    %767 = vmatprep.subr.mxu0 0.0
    %768 = vmatpush1.msra.mxu0 0.0
    %769 = vmatprep.subr.mxu0 0.0
    %770 = vmatpush1.msra.mxu0 0.0
    %771 = vmatprep.subr.mxu0 0.0
    %772 = vmatpush1.msra.mxu0 0.0
    %773 = vmatprep.subr.mxu0 0.0
    %774 = vmatpush1.msra.mxu0 0.0
    %775 = vmatprep.subr.mxu0 0.0
    %776 = vmatpush1.msra.mxu0 0.0
    %777 = vmatprep.subr.mxu0 0.0
    %778 = vmatpush1.msra.mxu0 0.0
    %779 = vmatprep.subr.mxu0 0.0
    %780 = vmatpush1.msra.mxu0 0.0
    %781 = vmatprep.subr.mxu0 0.0
    %782 = vmatpush1.msra.mxu0 0.0
    %783 = vmatprep.subr.mxu0 0.0
    %v784 = vand.u32 %v159, 4294901760
    %785 = vmatpush1.msra.mxu0 %v784
    %786 = vmatprep.subr.mxu0 0.0
    %v787 = vand.u32 %v139, 4294901760
    %788 = vmatpush1.msra.mxu0 %v787
    %789 = vmatprep.subr.mxu0 0.0
    %v790 = vand.u32 %v138, 4294901760
    %791 = vmatpush1.msra.mxu0 %v790
    %792 = vmatprep.subr.mxu0 0.0
    %v793 = vand.u32 %v137, 4294901760
    %794 = vmatpush1.msra.mxu0 %v793
    %795 = vmatprep.subr.mxu0 0.0
    %v796 = vand.u32 %v136, 4294901760
    %797 = vmatpush1.msra.mxu0 %v796
    %798 = vmatprep.subr.mxu0 0.0
    %v799 = vand.u32 %v135, 4294901760
    %800 = vmatpush1.msra.mxu0 %v799
    %801 = vmatprep.subr.mxu0 0.0
    %v802 = vand.u32 %v134, 4294901760
    %803 = vmatpush1.msra.mxu0 %v802
    %804 = vmatprep.subr.mxu0 0.0
    %v805 = vand.u32 %v133, 4294901760
    %806 = vmatpush1.msra.mxu0 %v805
    %807 = vmatprep.subr.mxu0 0.0
    %808 = vmatpush2.msra.mxu0 0.0
    %809 = vmatprep.subr.mxu0 0.0
    %810 = vmatpush2.msra.mxu0 0.0
    %811 = vmatprep.subr.mxu0 0.0
    %812 = vmatpush2.msra.mxu0 0.0
    %813 = vmatprep.subr.mxu0 0.0
    %814 = vmatpush2.msra.mxu0 0.0
    %815 = vmatprep.subr.mxu0 0.0
    %816 = vmatpush2.msra.mxu0 0.0
    %817 = vmatprep.subr.mxu0 0.0
    %818 = vmatpush2.msra.mxu0 0.0
    %819 = vmatprep.subr.mxu0 0.0
    %820 = vmatpush2.msra.mxu0 0.0
    %821 = vmatprep.subr.mxu0 0.0
    %822 = vmatpush2.msra.mxu0 0.0
    %823 = vmatprep.subr.mxu0 0.0
    %824 = vmatpush2.msra.mxu0 0.0
    %825 = vmatprep.subr.mxu0 0.0
    %826 = vmatpush2.msra.mxu0 0.0
    %827 = vmatprep.subr.mxu0 0.0
    %828 = vmatpush2.msra.mxu0 0.0
    %829 = vmatprep.subr.mxu0 0.0
    %830 = vmatpush2.msra.mxu0 0.0
    %831 = vmatprep.subr.mxu0 0.0
    %832 = vmatpush2.msra.mxu0 0.0
    %833 = vmatprep.subr.mxu0 0.0
    %834 = vmatpush2.msra.mxu0 0.0
    %835 = vmatprep.subr.mxu0 0.0
    %836 = vmatpush2.msra.mxu0 0.0
    %837 = vmatprep.subr.mxu0 0.0
    %838 = vmatpush2.msra.mxu0 0.0
    %839 = vmatprep.mubr.f32.mxu0 0.0
    %v840 = vand.u32 %v143, 4294901760
    %841 = vmatmul.mubr.f32.gmra.mxu0 %v840
    %v842 = vpop.f32.mrf.mxu0
    %v843 = vadd.f32 %v740, %v842
    %v844 = vpop.f32.mrf.mxu0
    %845 = vmatprep.mubr.f32.mxu0 0.0
    %v846 = vand.u32 %v146, 4294901760
    %847 = vmatmul.mubr.f32.gmra.mxu0 %v846
    %v848 = vpop.f32.mrf.mxu0
    %v849 = vadd.f32 %v746, %v848
    %v850 = vpop.f32.mrf.mxu0
    %851 = vmatprep.mubr.f32.mxu0 0.0
    %v852 = vand.u32 %v149, 4294901760
    %853 = vmatmul.mubr.f32.gmra.mxu0 %v852
    %v854 = vpop.f32.mrf.mxu0
    %v855 = vadd.f32 %v752, %v854
    %v856 = vpop.f32.mrf.mxu0
    %857 = vmatprep.mubr.f32.mxu0 0.0
    %v858 = vand.u32 %v152, 4294901760
    %859 = vmatmul.mubr.f32.gmra.mxu0 %v858
    %v860 = vpop.f32.mrf.mxu0
    %v861 = vadd.f32 %v758, %v860
    %v862 = vpop.f32.mrf.mxu0
    %863 = vmatprep.mubr.f32.mxu0 0.0
    %v864 = vand.u32 %v155, 4294901760
    %865 = vmatmul.mubr.f32.gmra.mxu0 %v864
    %v866 = vpop.f32.mrf.mxu0
    %v867 = vadd.f32 %v764, %v866
    %v868 = vpop.f32.mrf.mxu0
    %869 = vdwg.mxu0
    %v870 = vmul.f32 %v843, %v843
    %v871 = vmul.f32 %v849, %v849
    %v872 = vmul.f32 %v855, %v855
    %v873 = vmul.f32 %v861, %v861
    %v874 = vadd.f32 %v870, %v871
    %v875 = vadd.f32 %v874, %v872
    %v876 = vadd.f32 %v875, %v873
    %v877 = vrot.slane %v876, 4
    %v878 = vadd.f32 %v876, %v877
    %v879 = vrot.slane %v878, 2
    %v880 = vadd.f32 %v878, %v879
    %v881 = vrot.slane %v880, 1
    %v882 = vadd.f32 %v880, %v881
    %v883 = vmul.f32 %v882, 0.5
    %v884 = vadd.f32 %v867, %v883
    %s885 = sld [smem:[#allocation2]]
    %v886 = vstv %s885
    %v887 = vadd.f32 %v884, %v886
    %v888 = vxor.u32 %v887, 2147483648
    %v889 = vmul.f32 %v888, 1.442695
    %v890 = vpow.pop %v889
    %v891 = vadd.f32 %v890, 1.0
    %v892 = vrcp.pop %v891
    %v893 = vmul.f32 1.0, %v892
    %894 = vst [vmem:[#allocation8] sm:$0x1] %v893
    // Predicated region
    $region22: #{tpu_custom_call.1} parent=1 // pred_check
      _
    $region23: #{tpu_custom_call.1} parent=1 // pred_check_branch
      %896 = sbr.rel (0) target = $region25
    $region24: #{tpu_custom_call.1} parent=1 // pred_region
      %s898 = ssub.s32 16, 16
      %899 = vsyncadd [#allocation5], %s898
      %s901 = sshll.u32 [#allocation8], 4
      %s902 = int_to_ptr.vmem [resolvable:$true] %s901
      %904 = dma.vmem_to_hbm [thread:$0]  %s902, 16, %s3, [#allocation5]
    $region25: #{tpu_custom_call.1} parent=1 // pred_fallthru
      _
    // Predicated region
    $region26: #{tpu_custom_call.1} parent=1 // pred_check
      _
    $region27: #{tpu_custom_call.1} parent=1 // pred_check_branch
      %906 = sbr.rel (0) target = $region29
    $region28: #{tpu_custom_call.1} parent=1 // pred_region
      %907 = dma.done [#allocation5], 16
    $region29: #{tpu_custom_call.1} parent=1 // pred_fallthru
      _
    %908 = vsyncpa [#allocation4], 1
    %909 = vsyncpa [#allocation7], 1
    %910 = vsyncpa [#allocation5], 1

</llo_original>
